<compile_context>
chip_gen: v7x
topology: tpu7x:2x2x1
jax: 0.10.0
libtpu: 0.0.40
codegen_flags: <defaults>
</compile_context>

<pallas_src>
import math
from functools import partial

import jax
import jax.numpy as jnp
from jax.experimental import pallas as pl
from jax.experimental.pallas import tpu as pltpu


# ----------------------------------------------------------------------------
# Kernel
# ----------------------------------------------------------------------------
def _simam_kernel(x_ref, o_ref, *, hw, e_lambda):
    # x_ref / o_ref: (1, cblk, H*W)
    x = x_ref[...].astype(jnp.float32)

    # Per-channel spatial mean (cross-lane reduce, XLU).
    mu = jnp.sum(x, axis=-1, keepdims=True) * (1.0 / hw)          # (1, cblk, 1)
    d = (x - mu) ** 2                                             # (1, cblk, HW)
    s = jnp.sum(d, axis=-1, keepdims=True)                        # (1, cblk, 1)

    # Per-channel reciprocal of 4*(s/n + e_lambda) on the EUP (approx), then a
    # cheap broadcast multiply instead of a full-tensor divide.
    n = hw - 1.0
    inv_denom = pl.reciprocal(4.0 * (s * (1.0 / n) + e_lambda), approx=True)
    y = d * inv_denom + 0.5

    # sigmoid(y) = 1 / (1 + exp(-y)) : exp + approx reciprocal, both EUP.
    sig = pl.reciprocal(1.0 + jnp.exp(-y), approx=True)

    o_ref[...] = (x * sig).astype(o_ref.dtype)


# ----------------------------------------------------------------------------
# Wrapper
# ----------------------------------------------------------------------------
def _pick_channel_block(C, hw, itemsize, budget_bytes=2 * 1024 * 1024):
    """Largest channel block that (a) keeps the block under ~budget bytes and
    (b) satisfies the TPU layout rule (multiple of 8, or the full C dim)."""
    row_bytes = max(1, hw * itemsize)
    max_c = max(1, budget_bytes // row_bytes)
    if C <= max_c:
        return C
    best = None
    for d in range(8, min(C, max_c) + 1, 8):
        if C % d == 0:
            best = d
    return best if best is not None else C


def simam(x, e_lambda=1e-4):
    """SimAM attention. x: (B, C, H, W) (NCHW, like the PyTorch module)."""
    B, C, H, W = x.shape
    hw = H * W
    xf = x.reshape(B, C, hw)  # contiguous reshape: spatial axis -> lanes

    cblk = _pick_channel_block(C, hw, jnp.dtype(x.dtype).itemsize)
    grid = (B, C // cblk)

    kern = partial(_simam_kernel, hw=float(hw), e_lambda=float(e_lambda))
    out = pl.pallas_call(
        kern,
        out_shape=jax.ShapeDtypeStruct((B, C, hw), x.dtype),
        grid=grid,
        in_specs=[pl.BlockSpec((1, cblk, hw), lambda b, c: (b, c, 0))],
        out_specs=pl.BlockSpec((1, cblk, hw), lambda b, c: (b, c, 0)),
        compiler_params=pltpu.CompilerParams(
            dimension_semantics=("parallel", "parallel"),
        ),
    )(xf)
    return out.reshape(B, C, H, W)


# ----------------------------------------------------------------------------
# Pure-JAX reference (mirrors the PyTorch forward exactly)
# ----------------------------------------------------------------------------
def simam_ref(x, e_lambda=1e-4):
    b, c, h, w = x.shape
    n = w * h - 1
    mu = jnp.mean(x, axis=(2, 3), keepdims=True)
    d = (x - mu) ** 2
    y = d / (4.0 * (jnp.sum(d, axis=(2, 3), keepdims=True) / n + e_lambda)) + 0.5
    return x * jax.nn.sigmoid(y)


if __name__ == "__main__":
    key = jax.random.PRNGKey(0)
    x = jax.random.normal(key, (2, 4, 16, 16), jnp.float32)  # (B, C, H, W)

    out = simam(x, e_lambda=1e-4)
    jax.block_until_ready(out)

    ref = simam_ref(x, e_lambda=1e-4)
    assert out.shape == x.shape, out.shape
    max_err = float(jnp.max(jnp.abs(out - ref)))
    # approx reciprocal (EUP) tolerance
    assert max_err < 1e-2, f"max abs error {max_err}"

    print("KERNEL_OK")
</pallas_src>

<mosaic_0001>
module attributes {stable_mosaic.version = 11 : i64} {
  func.func @_simam_kernel(%arg0: i32, %arg1: i32, %arg2: memref<1x4x256xf32, #tpu.memory_space<vmem>>, %arg3: memref<1x4x256xf32, #tpu.memory_space<vmem>>) attributes {dimension_semantics = [#tpu.dimension_semantics<parallel>, #tpu.dimension_semantics<parallel>], iteration_bounds = array<i64: 2, 1>, scalar_prefetch = 0 : i64, scratch_operands = 0 : i64, tpu.core_type = #tpu.core_type<tc>, window_params = [{transform_indices = @transform_0, window_bounds = array<i64: 1, 4, 256>}, {transform_indices = @transform_1, window_bounds = array<i64: 1, 4, 256>}]} {
    %c0 = arith.constant 0 : index
    %c0_0 = arith.constant 0 : index
    %c0_1 = arith.constant 0 : index
    %0 = vector.load %arg2[%c0, %c0_0, %c0_1] : memref<1x4x256xf32, #tpu.memory_space<vmem>>, vector<1x4x256xf32>
    %cst = arith.constant dense<0.000000e+00> : vector<1x4xf32>
    %1 = vector.multi_reduction <add>, %0, %cst [2] : vector<1x4x256xf32> to vector<1x4xf32>
    %2 = vector.shape_cast %1 : vector<1x4xf32> to vector<1x4x1xf32>
    %cst_2 = arith.constant 3.906250e-03 : f32
    %3 = vector.broadcast %cst_2 : f32 to vector<1x4x1xf32>
    %4 = arith.mulf %2, %3 : vector<1x4x1xf32>
    %5 = vector.broadcast %4 : vector<1x4x1xf32> to vector<1x4x256xf32>
    %6 = arith.subf %0, %5 : vector<1x4x256xf32>
    %7 = arith.mulf %6, %6 : vector<1x4x256xf32>
    %cst_3 = arith.constant dense<0.000000e+00> : vector<1x4xf32>
    %8 = vector.multi_reduction <add>, %7, %cst_3 [2] : vector<1x4x256xf32> to vector<1x4xf32>
    %9 = vector.shape_cast %8 : vector<1x4xf32> to vector<1x4x1xf32>
    %cst_4 = arith.constant 0.00392156886 : f32
    %10 = vector.broadcast %cst_4 : f32 to vector<1x4x1xf32>
    %11 = arith.mulf %9, %10 : vector<1x4x1xf32>
    %cst_5 = arith.constant 9.99999974E-5 : f32
    %12 = vector.broadcast %cst_5 : f32 to vector<1x4x1xf32>
    %13 = arith.addf %11, %12 : vector<1x4x1xf32>
    %cst_6 = arith.constant 4.000000e+00 : f32
    %14 = vector.broadcast %cst_6 : f32 to vector<1x4x1xf32>
    %15 = arith.mulf %14, %13 : vector<1x4x1xf32>
    %16 = tpu.reciprocal %15 {approx = true} : vector<1x4x1xf32> -> vector<1x4x1xf32>
    %17 = vector.broadcast %16 : vector<1x4x1xf32> to vector<1x4x256xf32>
    %18 = arith.mulf %7, %17 : vector<1x4x256xf32>
    %cst_7 = arith.constant 5.000000e-01 : f32
    %19 = vector.broadcast %cst_7 : f32 to vector<1x4x256xf32>
    %20 = arith.addf %18, %19 : vector<1x4x256xf32>
    %cst_8 = arith.constant 0.000000e+00 : f32
    %21 = vector.broadcast %cst_8 : f32 to vector<1x4x256xf32>
    %22 = arith.subf %21, %20 : vector<1x4x256xf32>
    %23 = math.exp %22 : vector<1x4x256xf32>
    %cst_9 = arith.constant 1.000000e+00 : f32
    %24 = vector.broadcast %cst_9 : f32 to vector<1x4x256xf32>
    %25 = arith.addf %24, %23 : vector<1x4x256xf32>
    %26 = tpu.reciprocal %25 {approx = true} : vector<1x4x256xf32> -> vector<1x4x256xf32>
    %27 = arith.mulf %0, %26 : vector<1x4x256xf32>
    %c0_10 = arith.constant 0 : index
    %c0_11 = arith.constant 0 : index
    %c0_12 = arith.constant 0 : index
    %28 = vector.load %arg3[%c0_10, %c0_11, %c0_12] : memref<1x4x256xf32, #tpu.memory_space<vmem>>, vector<1x4x256xf32>
    tpu.vector_store %arg3[%c0_10, %c0_11, %c0_12], %27 {strides = array<i32>} : memref<1x4x256xf32, #tpu.memory_space<vmem>>, vector<1x4x256xf32>,
    return
  }
  func.func @transform_0(%arg0: i32, %arg1: i32) -> (i32, i32, i32) {
    %c0_i32 = arith.constant 0 : i32
    %c0_i32_0 = arith.constant 0 : i32
    return %arg0, %arg1, %c0_i32 : i32, i32, i32
  }
  func.func @transform_1(%arg0: i32, %arg1: i32) -> (i32, i32, i32) {
    %c0_i32 = arith.constant 0 : i32
    %c0_i32_0 = arith.constant 0 : i32
    return %arg0, %arg1, %c0_i32 : i32, i32, i32
  }
}

</mosaic_0001>

<llo_original>
// kernel: tpu_custom_call.1
$region0: #{tpu_custom_call.1}
  #allocation0 [shape = 'u32[]', space=smem, size = 0x4, offset = 0x4, fixed_abs, tag = 'smem constant byte address 0x4 - core index']
  #allocation1 [shape = 'u32[144,128]{1,0:T(1,128)}', space=vmem, size = 0x12000, scoped, tag = 'internal scratch']
  %s0 = inlined_call_operand.hbm [shape: f32[2,4,256], index: 0, kind: input, shape index: {}]
  %s1 = inlined_call_operand.hbm [shape: f32[2,4,256], index: 1, kind: output, shape index: {}]
  %s2 = sld [smem:[#allocation0]]
  $region41: #{tpu_custom_call.1} parent=0
    _
  %s4 = ssub.s32 1, %s2
  %s5 = scalar_select 0, %s4, %s2
  $region1: #{tpu_custom_call.1} parent=0
    #allocation2 [shape = 'u8[8192]{0}', space=vmem, size = 0x2000, scoped, tag = 'input window, operand 0']
    #allocation3 [shape = 's32[2]{0}', space=sflag, size = 0x8, scoped, tag = 'scoped memory for tpu_custom_call.1']
    #allocation4 [shape = 's32[2]{0}', space=sflag, size = 0x8, scoped, tag = 'scoped memory for tpu_custom_call.1']
    #allocation5 [shape = 'u8[8192]{0}', space=vmem, size = 0x2000, scoped, tag = 'output window, operand 0']
    %6 = vsyncpa [#allocation3], 0
    %s7 = scalar_lea.sflag [#allocation3], 1
    %8 = vsyncpa %s7, 0
    %9 = vsyncpa [#allocation4], 0
    %s10 = scalar_lea.sflag [#allocation4], 1
    %11 = vsyncpa %s10, 0
    loop: start=0, step=1, limit=4
    $region2: #{tpu_custom_call.1} parent=1 // loop_pre_header
      _
    $region3: #{tpu_custom_call.1} parent=1 // loop_header
      %s13 = sphi 0, %s17
      %p14 = scmp.ge.s32.totalorder %s13, 4
      %s20 = sphi 0, %s32
      %s21 = sphi 0, %s28
      %s22 = sphi 0, %s20
      %s23 = sphi 0, %s21
      %s24 = sphi 0, %s22
      %s25 = sphi 0, %s23
      %s37 = sphi 0, %s39
      %s40 = sphi 0, %s37
      %s41 = sphi 0, %s40
      %s57 = sphi 0, %s41
      %s65 = sphi 0, %s67
      %s68 = sphi 0, %s65
      %s69 = sphi 0, %s68
      %s85 = sphi 0, %s69
    $region4: #{tpu_custom_call.1} parent=1 // loop_header_branch
      %16 = sbr.rel (%p14) target = $region8
    $region5: #{tpu_custom_call.1} parent=1 // loop_body
      %s18 = ssub.s32 %s13, 1
      %s19 = ssub.s32 %s13, 2
      %s26 = sadd.s32 1, %s21
      %p27 = scmp.ge.s32.totalorder %s26, 1
      %s28 = scalar_select %p27, 0, %s26
      %s29 = sadd.s32 1, %s20
      %s30 = scalar_select %p27, %s29, %s20
      %p31 = scmp.ge.s32.totalorder %s30, 2
      %s32 = scalar_select %p31, 0, %s30
      %s33 = ssub.s32 %s20, %s32
      %s34 = ssub.s32 %s21, %s28
      %s35 = sor.u32 %s33, %s34
      %p36 = scmp.eq.s32.totalorder %s35, 0
      %s38 = sadd.s32 %s37, 1
      %s39 = scalar_select %p36, %s37, %s38
      %p42 = pneg %p36
      %p43 = scmp.eq.s32.totalorder %s13, 1
      %p44 = por %p42, %p43
      %p45 = scmp.ne.s32.totalorder %s37, %s40
      %p46 = scmp.eq.s32.totalorder %s13, 0
      %p47 = por %p45, %p46
      %p48 = scmp.ne.s32.totalorder %s37, %s40
      %p49 = scmp.eq.s32.totalorder %s18, 1
      %p50 = por %p48, %p49
      %p51 = scmp.ne.s32.totalorder %s40, %s41
      %p52 = scmp.eq.s32.totalorder %s18, 0
      %p53 = por %p51, %p52
      %p54 = scmp.ne.s32.totalorder %s40, %s41
      %p55 = scmp.eq.s32.totalorder %s19, 1
      %p56 = por %p54, %p55
      %p58 = scmp.ne.s32.totalorder %s41, %s57
      %p59 = scmp.eq.s32.totalorder %s19, 0
      %p60 = por %p58, %p59
      %s61 = ssub.s32 %s20, %s32
      %s62 = ssub.s32 %s21, %s28
      %s63 = sor.u32 %s61, %s62
      %p64 = scmp.eq.s32.totalorder %s63, 0
      %s66 = sadd.s32 %s65, 1
      %s67 = scalar_select %p64, %s65, %s66
      %p70 = pneg %p64
      %p71 = scmp.eq.s32.totalorder %s13, 1
      %p72 = por %p70, %p71
      %p73 = scmp.ne.s32.totalorder %s65, %s68
      %p74 = scmp.eq.s32.totalorder %s13, 0
      %p75 = por %p73, %p74
      %p76 = scmp.ne.s32.totalorder %s65, %s68
      %p77 = scmp.eq.s32.totalorder %s18, 1
      %p78 = por %p76, %p77
      %p79 = scmp.ne.s32.totalorder %s68, %s69
      %p80 = scmp.eq.s32.totalorder %s18, 0
      %p81 = por %p79, %p80
      %p82 = scmp.ne.s32.totalorder %s68, %s69
      %p83 = scmp.eq.s32.totalorder %s19, 1
      %p84 = por %p82, %p83
      %p86 = scmp.ne.s32.totalorder %s69, %s85
      %p87 = scmp.eq.s32.totalorder %s19, 0
      %p88 = por %p86, %p87
      %p89 = scmp.le.s32.totalorder 1, %s13
      %p90 = scmp.lt.s32.totalorder %s13, 3
      %p91 = pnand %p89, %p90
      %p92 = pneg %p91
      // Predicated region
      $region9: #{tpu_custom_call.1} parent=5 // pred_check
        _
      $region10: #{tpu_custom_call.1} parent=5 // pred_check_branch
        %94 = sbr.rel (%p91) target = $region12
      $region11: #{tpu_custom_call.1} parent=5 // pred_region
        %s95 = ssub.s32 %s13, 1
      $region12: #{tpu_custom_call.1} parent=5 // pred_fallthru
        _
      %p96 = scmp.lt.s32.totalorder %s13, 2
      // Predicated region
      $region13: #{tpu_custom_call.1} parent=5 // pred_check
        %p97 = pneg %p96
      $region14: #{tpu_custom_call.1} parent=5 // pred_check_branch
        %99 = sbr.rel (%p97) target = $region16
      $region15: #{tpu_custom_call.1} parent=5 // pred_region
        // Predicated region
        $region17: #{tpu_custom_call.1} parent=15 // pred_check
          %p100 = pneg %p47
        $region18: #{tpu_custom_call.1} parent=15 // pred_check_branch
          %102 = sbr.rel (%p100) target = $region20
        $region19: #{tpu_custom_call.1} parent=15 // pred_region
          %s103 = sand.u32 %s37, 1
          %s104 = scalar_lea.sflag [#allocation3], %s103
          %s105 = sand.u32 %s37, 1
          %s106 = smul.addr %s105, 8
          %s107 = scalar_lea.vmem [#allocation2], %s106
          %s109 = ssub.s32 128, 128
          %110 = vsyncadd %s104, %s109
          %s111 = smul.addr %s21, 2
          %s112 = smul.addr %s20, 2
          %s113 = sadd.s32 %s111, %s112
          %s114 = smul.addr %s113, 64
          %s115 = scalar_lea.hbm %s0, %s114
          %s117 = sshll.u32 %s107, 4
          %s118 = int_to_ptr.vmem [resolvable:$true] %s117
          %120 = dma.hbm_to_vmem [thread:$0]  %s115, 128, %s118, %s104
        $region20: #{tpu_custom_call.1} parent=15 // pred_fallthru
          _
      $region16: #{tpu_custom_call.1} parent=5 // pred_fallthru
        _
      %p121 = scmp.le.s32.totalorder 1, %s13
      %p122 = scmp.lt.s32.totalorder %s13, 3
      %p123 = pnand %p121, %p122
      %p124 = pneg %p123
      // Predicated region
      $region21: #{tpu_custom_call.1} parent=5 // pred_check
        _
      $region22: #{tpu_custom_call.1} parent=5 // pred_check_branch
        %126 = sbr.rel (%p123) target = $region24
      $region23: #{tpu_custom_call.1} parent=5 // pred_region
        %s127 = ssub.s32 %s13, 1
        %s128 = sand.u32 %s40, 1
        %s129 = scalar_lea.sflag [#allocation3], %s128
        %s130 = sand.u32 %s40, 1
        %s131 = smul.addr %s130, 8
        %s132 = scalar_lea.vmem [#allocation2], %s131
        // Predicated region
        $region25: #{tpu_custom_call.1} parent=23 // pred_check
          %p133 = pneg %p53
        $region26: #{tpu_custom_call.1} parent=23 // pred_check_branch
          %135 = sbr.rel (%p133) target = $region28
        $region27: #{tpu_custom_call.1} parent=23 // pred_region
          %136 = dma.done %s129, 128
        $region28: #{tpu_custom_call.1} parent=23 // pred_fallthru
          _
        %s137 = sand.u32 %s40, 1
        %s138 = scalar_lea.sflag [#allocation3], %s137
        %s139 = sand.u32 %s40, 1
        %s140 = smul.addr %s139, 8
        %s141 = scalar_lea.vmem [#allocation2], %s140
        %p142 = pneg %p53
        %p143 = pneg %p50
        %p144 = pneg %p81
        %p145 = pneg %p78
        %s146 = sand.u32 %s68, 1
        %s147 = scalar_lea.sflag [#allocation4], %s146
        %s148 = sand.u32 %s68, 1
        %s149 = smul.addr %s148, 8
        %s150 = scalar_lea.vmem [#allocation5], %s149
        %v151 = vld [vmem:[%s132] sm:$0xff]
        %v153 = vcombine.high %v151, %v151
        %vm155 = vcmask 1043456
        %v156 = vsel %vm155, %v151, 0.0
        %v157 = vsel %vm155, %v153, 0.0
        %v158 = vadd.f32 %v156, %v157
        %159 = vadd.xlane.f32.xlu0 %v158
        %v160 = vpop.xlane.xlu0 %159
        %v161 = vmul.f32 %v160, 0.00390625
        %v164 = vunpack.c.l.s4 839922192
        %v165 = vunpack.c.0.s8 %v164
        %v166 = vlaneseq
        %v167 = vshrl.u32 %v166, 7
        %v168 = vsub.s32 %v165, %v167
        %v169 = vrot.slane %v161, %v168
        %v171 = vsub.f32 %v151, %v169
        %v172 = vmul.f32 %v171, %v171
        %v174 = vcombine.high %v172, %v172
        %v176 = vsel %vm155, %v172, 0.0
        %v177 = vsel %vm155, %v174, 0.0
        %v178 = vadd.f32 %v176, %v177
        %179 = vadd.xlane.f32.xlu0 %v178
        %v180 = vpop.xlane.xlu0 %179
        %v181 = vmul.f32 %v180, 0.003921569
        %v182 = vadd.f32 %v181, 0.0001
        %v183 = vmul.f32 %v182, 4.0
        %v184 = vrcp.pop %v183
        %v187 = vunpack.c.l.s4 839922192
        %v188 = vunpack.c.0.s8 %v187
        %v189 = vlaneseq
        %v190 = vshrl.u32 %v189, 7
        %v191 = vsub.s32 %v188, %v190
        %v192 = vrot.slane %v184, %v191
        %v194 = vmul.f32 %v172, %v192
        %v195 = vadd.f32 %v194, 0.5
        %v196 = vsub.f32 0.0, %v195
        %v197 = vmul.f32 %v196, 1.442695
        %v198 = vpow.pop %v197
        %v199 = vadd.f32 %v198, 1.0
        %v200 = vrcp.pop %v199
        %v201 = vmul.f32 %v151, %v200
        %202 = vst [vmem:[%s150] sm:$0xff] %v201
        %s203 = sand.u32 %s68, 1
        %s204 = scalar_lea.sflag [#allocation4], %s203
        %s205 = sand.u32 %s68, 1
        %s206 = smul.addr %s205, 8
        %s207 = scalar_lea.vmem [#allocation5], %s206
        // Predicated region
        $region29: #{tpu_custom_call.1} parent=23 // pred_check
          %p208 = pneg %p78
        $region30: #{tpu_custom_call.1} parent=23 // pred_check_branch
          %210 = sbr.rel (%p208) target = $region32
        $region31: #{tpu_custom_call.1} parent=23 // pred_region
          %s212 = ssub.s32 128, 128
          %213 = vsyncadd %s204, %s212
          %s214 = smul.addr %s23, 2
          %s215 = smul.addr %s22, 2
          %s216 = sadd.s32 %s214, %s215
          %s217 = smul.addr %s216, 64
          %s218 = scalar_lea.hbm %s1, %s217
          %s220 = sshll.u32 %s207, 4
          %s221 = int_to_ptr.vmem [resolvable:$true] %s220
          %223 = dma.vmem_to_hbm [thread:$0]  %s221, 128, %s218, %s204
        $region32: #{tpu_custom_call.1} parent=23 // pred_fallthru
          _
      $region24: #{tpu_custom_call.1} parent=5 // pred_fallthru
        _
      %p224 = scmp.le.s32.totalorder 2, %s13
      // Predicated region
      $region33: #{tpu_custom_call.1} parent=5 // pred_check
        %p225 = pneg %p224
      $region34: #{tpu_custom_call.1} parent=5 // pred_check_branch
        %227 = sbr.rel (%p225) target = $region36
      $region35: #{tpu_custom_call.1} parent=5 // pred_region
        %s228 = ssub.s32 %s13, 2
        // Predicated region
        $region37: #{tpu_custom_call.1} parent=35 // pred_check
          %p229 = pneg %p84
        $region38: #{tpu_custom_call.1} parent=35 // pred_check_branch
          %231 = sbr.rel (%p229) target = $region40
        $region39: #{tpu_custom_call.1} parent=35 // pred_region
          %s232 = sand.u32 %s69, 1
          %s233 = scalar_lea.sflag [#allocation4], %s232
          %s234 = sand.u32 %s69, 1
          %s235 = smul.addr %s234, 8
          %s236 = scalar_lea.vmem [#allocation5], %s235
          %237 = dma.done %s233, 128
        $region40: #{tpu_custom_call.1} parent=35 // pred_fallthru
          _
      $region36: #{tpu_custom_call.1} parent=5 // pred_fallthru
        _
    $region6: #{tpu_custom_call.1} parent=1 // loop_footer
      %s17 = sadd.s32 1, %s13
    $region7: #{tpu_custom_call.1} parent=1 // loop_footer_branch
      %12 = sbr.rel target = $region3
    $region8: #{tpu_custom_call.1} parent=1 // loop_exit
      _
    %238 = vsyncpa [#allocation3], 1
    %s239 = scalar_lea.sflag [#allocation3], 1
    %240 = vsyncpa %s239, 1
    %241 = vsyncpa [#allocation4], 1
    %s242 = scalar_lea.sflag [#allocation4], 1
    %243 = vsyncpa %s242, 1

</llo_original>
